<compile_context>
chip_gen: v6e
topology: v6e:2x2x1
jax: 0.10.0
libtpu: 0.0.40
codegen_flags: <defaults>
</compile_context>

<pallas_src>
import functools

import jax
import jax.numpy as jnp
from jax.experimental import pallas as pl
from jax.experimental.pallas import tpu as pltpu


HIDDEN = 64            # per-head hidden width (PyTorch module)
FUSED = 2 * HIDDEN     # fused twin-head width = 128 (one full MXU lane tile)
OUT_SUBLANES = 8       # (8, B) output slab: sublane 0 = q1, sublane 1 = q2
COMPUTE_DTYPE = jnp.bfloat16


def _critic_kernel(s_ref, a_ref, w1s_ref, w1a_ref, w2t_ref, w3t_ref,
                   b1_ref, bt_ref, out_ref):
    # Cast f32 input tiles to bf16 on the VPU (free slot) instead of in the wrapper.
    s = s_ref[...].astype(COMPUTE_DTYPE)              # (tb, sdim)
    a = a_ref[...].astype(COMPUTE_DTYPE)              # (tb, adim)

    # Layer 1 (fused q1/q2 heads, no [state, action] concat): (tb, 128), ReLU.
    z1 = (jnp.dot(s, w1s_ref[...], preferred_element_type=jnp.float32)
          + jnp.dot(a, w1a_ref[...], preferred_element_type=jnp.float32)
          + b1_ref[...])
    h1 = jnp.maximum(z1, 0.0)

    # Switch to batch-on-lanes layout so layer 3 can emit an (8, tb) output slab
    # instead of a (tb, 128) one (cuts the HBM write traffic 16x).
    h1_t = h1.T.astype(COMPUTE_DTYPE)                 # (128, tb) bf16

    b2c = bt_ref[:, 0:1]                              # (128, 1) f32, layer-2 bias column
    b3c = bt_ref[0:OUT_SUBLANES, 1:2]                 # (8, 1)   f32, layer-3 bias column

    # Layer 2 (block-diagonal [[W2,0],[0,W5]], transposed): (128, tb), ReLU.
    z2 = jnp.dot(w2t_ref[...], h1_t, preferred_element_type=jnp.float32) + b2c
    h2 = jnp.maximum(z2, 0.0).astype(COMPUTE_DTYPE)

    # Layer 3: sublane 0 = q1, sublane 1 = q2, sublanes 2..7 zero. Lane-dense f32 store.
    out_ref[...] = jnp.dot(w3t_ref[...], h2,
                           preferred_element_type=jnp.float32) + b3c


def _round_up(x, m):
    return (x + m - 1) // m * m


@functools.partial(jax.jit, static_argnames=("tile_b",))
def critic_forward(state, action, packed_params, tile_b=8192):
    """Pallas implementation of Critic.forward. Returns (q1, q2), each (B, 1) f32."""
    w1s, w1a, w2t, w3t, b1, bt = packed_params
    B, sdim = state.shape
    adim = action.shape[1]

    # Batch-tile selection.  No padding copy: the ragged final block is handled by
    # Pallas (garbage OOB rows are row-independent and masked off on store).
    if B <= 1024:
        tb = B                                          # one block == full array dims
    else:
        # >= 2 grid steps so both v7x TensorCores get work; non-full blocks must be
        # lane-aligned (128) because the output's last dim is the batch.
        tb = min(tile_b, _round_up(pl.cdiv(B, 2), 128))
    grid = (pl.cdiv(B, tb),)

    out = pl.pallas_call(
        _critic_kernel,
        out_shape=jax.ShapeDtypeStruct((OUT_SUBLANES, B), jnp.float32),
        grid=grid,
        in_specs=[
            pl.BlockSpec((tb, sdim), lambda i: (i, 0)),   # state tile (f32, cast in-kernel)
            pl.BlockSpec((tb, adim), lambda i: (i, 0)),   # action tile (f32, cast in-kernel)
            pl.BlockSpec(w1s.shape, lambda i: (0, 0)),    # weights: constant block index
            pl.BlockSpec(w1a.shape, lambda i: (0, 0)),    #   -> stay resident in VMEM
            pl.BlockSpec(w2t.shape, lambda i: (0, 0)),
            pl.BlockSpec(w3t.shape, lambda i: (0, 0)),
            pl.BlockSpec(b1.shape, lambda i: (0, 0)),
            pl.BlockSpec(bt.shape, lambda i: (0, 0)),
        ],
        out_specs=pl.BlockSpec((OUT_SUBLANES, tb), lambda i: (0, i)),
        compiler_params=pltpu.CompilerParams(
            dimension_semantics=("parallel",),
            vmem_limit_bytes=32 * 1024 * 1024),           # raise v5e's 16 MiB default
    )(state, action, w1s, w1a, w2t, w3t, b1, bt)

    # Two contiguous row reads of the tiny (8, B) slab; (1,B)->(B,1) is a free reshape.
    q1 = out[0].reshape(B, 1)
    q2 = out[1].reshape(B, 1)
    return q1, q2


def init_critic_params(key, state_dim, action_dim):
    """nn.Linear-style init: U(-1/sqrt(fan_in), 1/sqrt(fan_in)).
    Weights stored (in_features, out_features) so x @ W + b matches PyTorch."""
    D = state_dim + action_dim
    layer_dims = [(D, HIDDEN), (HIDDEN, HIDDEN), (HIDDEN, 1),   # l1, l2, l3
                  (D, HIDDEN), (HIDDEN, HIDDEN), (HIDDEN, 1)]   # l4, l5, l6
    params = []
    for (fan_in, fan_out) in layer_dims:
        key, wk, bk = jax.random.split(key, 3)
        bound = 1.0 / jnp.sqrt(jnp.float32(fan_in))
        w = jax.random.uniform(wk, (fan_in, fan_out), jnp.float32, -bound, bound)
        b = jax.random.uniform(bk, (1, fan_out), jnp.float32, -bound, bound)
        params.extend([w, b])
    return tuple(params)


def pack_critic_params(params, state_dim):
    """Host-side fusion of the twin heads into lane-dense packed weights."""
    w1, b1, w2, b2, w3, b3, w4, b4, w5, b5, w6, b6 = params

    # Layer 1: fuse heads along lanes; split rows into state/action blocks so the
    # kernel never materializes concat([state, action]).
    w1s = jnp.concatenate([w1[:state_dim], w4[:state_dim]], axis=1)   # (sdim, 128)
    w1a = jnp.concatenate([w1[state_dim:], w4[state_dim:]], axis=1)   # (adim, 128)
    b1p = jnp.concatenate([b1, b4], axis=1)                           # (1, 128)

    # Layer 2: block-diagonal keeps heads independent; stored TRANSPOSED because the
    # kernel runs layers 2/3 in a batch-on-lanes layout.
    z = jnp.zeros((HIDDEN, HIDDEN), jnp.float32)
    w2t = jnp.block([[w2, z], [z, w5]]).T                             # (128, 128)

    # Layer 3 (transposed): sublane 0 = q1 head, sublane 1 = q2 head, rest zero.
    w3t = jnp.zeros((OUT_SUBLANES, FUSED), jnp.float32)
    w3t = w3t.at[0, :HIDDEN].set(w3[:, 0])
    w3t = w3t.at[1, HIDDEN:].set(w6[:, 0])                            # (8, 128)

    # Column-layout biases for layers 2/3 packed into a single (128, 2) f32 slab.
    bt = jnp.zeros((FUSED, 2), jnp.float32)
    bt = bt.at[:, 0].set(jnp.concatenate([b2[0], b5[0]]))
    bt = bt.at[0, 1].set(b3[0, 0]).at[1, 1].set(b6[0, 0])

    return (w1s.astype(COMPUTE_DTYPE),
            w1a.astype(COMPUTE_DTYPE),
            w2t.astype(COMPUTE_DTYPE),
            w3t.astype(COMPUTE_DTYPE),
            b1p, bt)


def _reference_forward(state, action, params):
    """Pure-JAX f32 reference for sanity checking."""
    sa = jnp.concatenate([state, action], axis=1)
    w1, b1, w2, b2, w3, b3, w4, b4, w5, b5, w6, b6 = params
    h = jnp.maximum(sa @ w1 + b1, 0.0)
    h = jnp.maximum(h @ w2 + b2, 0.0)
    q1 = h @ w3 + b3
    g = jnp.maximum(sa @ w4 + b4, 0.0)
    g = jnp.maximum(g @ w5 + b5, 0.0)
    q2 = g @ w6 + b6
    return q1, q2


if __name__ == "__main__":
    key = jax.random.PRNGKey(0)
    state_dim, action_dim, batch = 16, 8, 8

    kp, ks, ka = jax.random.split(key, 3)
    params = init_critic_params(kp, state_dim, action_dim)
    state = jax.random.normal(ks, (batch, state_dim), jnp.float32)
    action = jax.random.normal(ka, (batch, action_dim), jnp.float32)

    packed = pack_critic_params(params, state_dim)

    q1, q2 = critic_forward(state, action, packed)
    jax.block_until_ready((q1, q2))

    r1, r2 = _reference_forward(state, action, params)
    assert q1.shape == (batch, 1) and q2.shape == (batch, 1)
    # bf16 operands (f32 accumulation) -> loosened tolerance vs. pure-f32 reference.
    assert jnp.allclose(q1, r1, atol=5e-2, rtol=5e-2)
    assert jnp.allclose(q2, r2, atol=5e-2, rtol=5e-2)

    print("KERNEL_OK")
</pallas_src>

<mosaic_0001>
module attributes {stable_mosaic.version = 11 : i64} {
  func.func @_critic_kernel(%arg0: i32, %arg1: memref<8x16xf32, #tpu.memory_space<vmem>>, %arg2: memref<8x8xf32, #tpu.memory_space<vmem>>, %arg3: memref<16x128xbf16, #tpu.memory_space<vmem>>, %arg4: memref<8x128xbf16, #tpu.memory_space<vmem>>, %arg5: memref<128x128xbf16, #tpu.memory_space<vmem>>, %arg6: memref<8x128xbf16, #tpu.memory_space<vmem>>, %arg7: memref<1x128xf32, #tpu.memory_space<vmem>>, %arg8: memref<128x2xf32, #tpu.memory_space<vmem>>, %arg9: memref<8x8xf32, #tpu.memory_space<vmem>>) attributes {dimension_semantics = [#tpu.dimension_semantics<parallel>], iteration_bounds = array<i64: 1>, scalar_prefetch = 0 : i64, scratch_operands = 0 : i64, tpu.core_type = #tpu.core_type<tc>, window_params = [{transform_indices = @transform_0, window_bounds = array<i64: 8, 16>}, {transform_indices = @transform_1, window_bounds = array<i64: 8, 8>}, {pipeline_mode = #tpu.pipeline_mode<synchronous>, transform_indices = @transform_2, window_bounds = array<i64: 16, 128>}, {pipeline_mode = #tpu.pipeline_mode<synchronous>, transform_indices = @transform_3, window_bounds = array<i64: 8, 128>}, {pipeline_mode = #tpu.pipeline_mode<synchronous>, transform_indices = @transform_4, window_bounds = array<i64: 128, 128>}, {pipeline_mode = #tpu.pipeline_mode<synchronous>, transform_indices = @transform_5, window_bounds = array<i64: 8, 128>}, {pipeline_mode = #tpu.pipeline_mode<synchronous>, transform_indices = @transform_6, window_bounds = array<i64: 1, 128>}, {pipeline_mode = #tpu.pipeline_mode<synchronous>, transform_indices = @transform_7, window_bounds = array<i64: 128, 2>}, {transform_indices = @transform_8, window_bounds = array<i64: 8, 8>}]} {
    %c0 = arith.constant 0 : index
    %c0_0 = arith.constant 0 : index
    %0 = vector.load %arg1[%c0, %c0_0] : memref<8x16xf32, #tpu.memory_space<vmem>>, vector<8x16xf32>
    %1 = arith.truncf %0 : vector<8x16xf32> to vector<8x16xbf16>
    %c0_1 = arith.constant 0 : index
    %c0_2 = arith.constant 0 : index
    %2 = vector.load %arg2[%c0_1, %c0_2] : memref<8x8xf32, #tpu.memory_space<vmem>>, vector<8x8xf32>
    %3 = arith.truncf %2 : vector<8x8xf32> to vector<8x8xbf16>
    %c0_3 = arith.constant 0 : index
    %c0_4 = arith.constant 0 : index
    %4 = vector.load %arg3[%c0_3, %c0_4] : memref<16x128xbf16, #tpu.memory_space<vmem>>, vector<16x128xbf16>
    %cst = arith.constant dense<0.000000e+00> : vector<8x128xf32>
    %5 = tpu.matmul %1, %4, %cst {dimension_numbers = #tpu.dot_dimension_numbers<[1], [0], [0], [1], [0, 0, 1, 1], [], []>} : vector<8x16xbf16>, vector<16x128xbf16>, vector<8x128xf32> -> vector<8x128xf32>
    %c0_5 = arith.constant 0 : index
    %c0_6 = arith.constant 0 : index
    %6 = vector.load %arg4[%c0_5, %c0_6] : memref<8x128xbf16, #tpu.memory_space<vmem>>, vector<8x128xbf16>
    %cst_7 = arith.constant dense<0.000000e+00> : vector<8x128xf32>
    %7 = tpu.matmul %3, %6, %cst_7 {dimension_numbers = #tpu.dot_dimension_numbers<[1], [0], [0], [1], [0, 0, 1, 1], [], []>} : vector<8x8xbf16>, vector<8x128xbf16>, vector<8x128xf32> -> vector<8x128xf32>
    %8 = arith.addf %5, %7 : vector<8x128xf32>
    %c0_8 = arith.constant 0 : index
    %c0_9 = arith.constant 0 : index
    %9 = vector.load %arg7[%c0_8, %c0_9] : memref<1x128xf32, #tpu.memory_space<vmem>>, vector<1x128xf32>
    %10 = vector.broadcast %9 : vector<1x128xf32> to vector<8x128xf32>
    %11 = arith.addf %8, %10 : vector<8x128xf32>
    %cst_10 = arith.constant 0.000000e+00 : f32
    %12 = vector.broadcast %cst_10 : f32 to vector<8x128xf32>
    %13 = arith.maximumf %11, %12 : vector<8x128xf32>
    %14 = tpu.transpose %13, [1, 0] : vector<8x128xf32> -> vector<128x8xf32>
    %15 = arith.truncf %14 : vector<128x8xf32> to vector<128x8xbf16>
    %c0_11 = arith.constant 0 : index
    %c0_12 = arith.constant 0 : index
    %16 = vector.load %arg8[%c0_11, %c0_12] : memref<128x2xf32, #tpu.memory_space<vmem>>, vector<128x1xf32>
    %c0_13 = arith.constant 0 : index
    %c1 = arith.constant 1 : index
    %17 = vector.load %arg8[%c0_13, %c1] : memref<128x2xf32, #tpu.memory_space<vmem>>, vector<8x1xf32>
    %c0_14 = arith.constant 0 : index
    %c0_15 = arith.constant 0 : index
    %18 = vector.load %arg5[%c0_14, %c0_15] : memref<128x128xbf16, #tpu.memory_space<vmem>>, vector<128x128xbf16>
    %cst_16 = arith.constant dense<0.000000e+00> : vector<128x8xf32>
    %19 = tpu.matmul %18, %15, %cst_16 {dimension_numbers = #tpu.dot_dimension_numbers<[1], [0], [0], [1], [0, 0, 1, 1], [], []>} : vector<128x128xbf16>, vector<128x8xbf16>, vector<128x8xf32> -> vector<128x8xf32>
    %20 = vector.broadcast %16 : vector<128x1xf32> to vector<128x8xf32>
    %21 = arith.addf %19, %20 : vector<128x8xf32>
    %cst_17 = arith.constant 0.000000e+00 : f32
    %22 = vector.broadcast %cst_17 : f32 to vector<128x8xf32>
    %23 = arith.maximumf %21, %22 : vector<128x8xf32>
    %24 = arith.truncf %23 : vector<128x8xf32> to vector<128x8xbf16>
    %c0_18 = arith.constant 0 : index
    %c0_19 = arith.constant 0 : index
    %25 = vector.load %arg6[%c0_18, %c0_19] : memref<8x128xbf16, #tpu.memory_space<vmem>>, vector<8x128xbf16>
    %cst_20 = arith.constant dense<0.000000e+00> : vector<8x8xf32>
    %26 = tpu.matmul %25, %24, %cst_20 {dimension_numbers = #tpu.dot_dimension_numbers<[1], [0], [0], [1], [0, 0, 1, 1], [], []>} : vector<8x128xbf16>, vector<128x8xbf16>, vector<8x8xf32> -> vector<8x8xf32>
    %27 = vector.broadcast %17 : vector<8x1xf32> to vector<8x8xf32>
    %28 = arith.addf %26, %27 : vector<8x8xf32>
    %c0_21 = arith.constant 0 : index
    %c0_22 = arith.constant 0 : index
    %29 = vector.load %arg9[%c0_21, %c0_22] : memref<8x8xf32, #tpu.memory_space<vmem>>, vector<8x8xf32>
    tpu.vector_store %arg9[%c0_21, %c0_22], %28 {strides = array<i32>} : memref<8x8xf32, #tpu.memory_space<vmem>>, vector<8x8xf32>,
    return
  }
  func.func @transform_0(%arg0: i32) -> (i32, i32) {
    %c0_i32 = arith.constant 0 : i32
    %c0_i32_0 = arith.constant 0 : i32
    return %arg0, %c0_i32 : i32, i32
  }
  func.func @transform_1(%arg0: i32) -> (i32, i32) {
    %c0_i32 = arith.constant 0 : i32
    %c0_i32_0 = arith.constant 0 : i32
    return %arg0, %c0_i32 : i32, i32
  }
  func.func @transform_2(%arg0: i32) -> (i32, i32) {
    %c0_i32 = arith.constant 0 : i32
    %c0_i32_0 = arith.constant 0 : i32
    %c0_i32_1 = arith.constant 0 : i32
    return %c0_i32, %c0_i32_0 : i32, i32
  }
  func.func @transform_3(%arg0: i32) -> (i32, i32) {
    %c0_i32 = arith.constant 0 : i32
    %c0_i32_0 = arith.constant 0 : i32
    %c0_i32_1 = arith.constant 0 : i32
    return %c0_i32, %c0_i32_0 : i32, i32
  }
  func.func @transform_4(%arg0: i32) -> (i32, i32) {
    %c0_i32 = arith.constant 0 : i32
    %c0_i32_0 = arith.constant 0 : i32
    %c0_i32_1 = arith.constant 0 : i32
    return %c0_i32, %c0_i32_0 : i32, i32
  }
  func.func @transform_5(%arg0: i32) -> (i32, i32) {
    %c0_i32 = arith.constant 0 : i32
    %c0_i32_0 = arith.constant 0 : i32
    %c0_i32_1 = arith.constant 0 : i32
    return %c0_i32, %c0_i32_0 : i32, i32
  }
  func.func @transform_6(%arg0: i32) -> (i32, i32) {
    %c0_i32 = arith.constant 0 : i32
    %c0_i32_0 = arith.constant 0 : i32
    %c0_i32_1 = arith.constant 0 : i32
    return %c0_i32, %c0_i32_0 : i32, i32
  }
  func.func @transform_7(%arg0: i32) -> (i32, i32) {
    %c0_i32 = arith.constant 0 : i32
    %c0_i32_0 = arith.constant 0 : i32
    %c0_i32_1 = arith.constant 0 : i32
    return %c0_i32, %c0_i32_0 : i32, i32
  }
  func.func @transform_8(%arg0: i32) -> (i32, i32) {
    %c0_i32 = arith.constant 0 : i32
    %c0_i32_0 = arith.constant 0 : i32
    return %c0_i32, %arg0 : i32, i32
  }
}

</mosaic_0001>

<llo_original>
// kernel: critic_forward.1
$region0: #{critic_forward.1}
  #allocation0 [shape = 'u32[]', space=smem, size = 0x4, offset = 0x4, fixed_abs, tag = 'smem constant byte address 0x4 - core index']
  #allocation1 [shape = 'u32[144,128]{1,0:T(1,128)}', space=vmem, size = 0x12000, scoped, tag = 'internal scratch']
  %s0 = inlined_call_operand.vmem [shape: f32[8,16], index: 0, kind: input, shape index: {}]
  %s1 = inlined_call_operand.vmem [shape: f32[8,8], index: 1, kind: input, shape index: {}]
  %s2 = inlined_call_operand.vmem [shape: bf16[16,128], index: 2, kind: input, shape index: {}]
  %s3 = inlined_call_operand.vmem [shape: bf16[8,128], index: 3, kind: input, shape index: {}]
  %s4 = inlined_call_operand.vmem [shape: bf16[128,128], index: 4, kind: input, shape index: {}]
  %s5 = inlined_call_operand.vmem [shape: bf16[8,128], index: 5, kind: input, shape index: {}]
  %s6 = inlined_call_operand.vmem [shape: f32[1,128], index: 6, kind: input, shape index: {}]
  %s7 = inlined_call_operand.vmem [shape: f32[128,2], index: 7, kind: input, shape index: {}]
  %s8 = inlined_call_operand.vmem [shape: f32[8,8], index: 8, kind: output, shape index: {}]
  %s9 = sld [smem:[#allocation0]]
  $region42: #{critic_forward.1} parent=0
    _
  %s11 = ssub.s32 1, %s9
  %s12 = scalar_select 0, %s11, %s9
  // Predicated region
  $region2: #{critic_forward.1} parent=0 // pred_check
    _
  $region3: #{critic_forward.1} parent=0 // pred_check_branch
    %14 = sbr.rel (0) target = $region5
  $region4: #{critic_forward.1} parent=0 // pred_region
    _
  $region5: #{critic_forward.1} parent=0 // pred_fallthru
    _
  // Predicated region
  $region6: #{critic_forward.1} parent=0 // pred_check
    _
  $region7: #{critic_forward.1} parent=0 // pred_check_branch
    %16 = sbr.rel (0) target = $region9
  $region8: #{critic_forward.1} parent=0 // pred_region
    _
  $region9: #{critic_forward.1} parent=0 // pred_fallthru
    _
  // Predicated region
  $region10: #{critic_forward.1} parent=0 // pred_check
    _
  $region11: #{critic_forward.1} parent=0 // pred_check_branch
    %18 = sbr.rel (0) target = $region13
  $region12: #{critic_forward.1} parent=0 // pred_region
    _
  $region13: #{critic_forward.1} parent=0 // pred_fallthru
    _
  // Predicated region
  $region14: #{critic_forward.1} parent=0 // pred_check
    _
  $region15: #{critic_forward.1} parent=0 // pred_check_branch
    %20 = sbr.rel (0) target = $region17
  $region16: #{critic_forward.1} parent=0 // pred_region
    _
  $region17: #{critic_forward.1} parent=0 // pred_fallthru
    _
  // Predicated region
  $region18: #{critic_forward.1} parent=0 // pred_check
    _
  $region19: #{critic_forward.1} parent=0 // pred_check_branch
    %22 = sbr.rel (0) target = $region21
  $region20: #{critic_forward.1} parent=0 // pred_region
    _
  $region21: #{critic_forward.1} parent=0 // pred_fallthru
    _
  // Predicated region
  $region22: #{critic_forward.1} parent=0 // pred_check
    _
  $region23: #{critic_forward.1} parent=0 // pred_check_branch
    %24 = sbr.rel (0) target = $region25
  $region24: #{critic_forward.1} parent=0 // pred_region
    _
  $region25: #{critic_forward.1} parent=0 // pred_fallthru
    _
  // Predicated region
  $region26: #{critic_forward.1} parent=0 // pred_check
    _
  $region27: #{critic_forward.1} parent=0 // pred_check_branch
    %26 = sbr.rel (0) target = $region29
  $region28: #{critic_forward.1} parent=0 // pred_region
    _
  $region29: #{critic_forward.1} parent=0 // pred_fallthru
    _
  // Predicated region
  $region30: #{critic_forward.1} parent=0 // pred_check
    _
  $region31: #{critic_forward.1} parent=0 // pred_check_branch
    %28 = sbr.rel (0) target = $region33
  $region32: #{critic_forward.1} parent=0 // pred_region
    _
  $region33: #{critic_forward.1} parent=0 // pred_fallthru
    _
  %v30 = vld [vmem:[%s0] sm:$0xff]
  %v31 = vpack.c.bf16 %v30, %v30
  %v32 = vld [vmem:[%s1] sm:$0xff]
  %v33 = vpack.c.bf16 %v32, %v32
  %v34 = vld [vmem:[%s2] sm:$0xf]
  %v35 = vld [vmem:[%s2 + $0x4] sm:$0xf]
  %v36 = vld [vmem:[%s3] sm:$0xf]
  %vm37 = vcmask 64512
  %v39 = vsel %vm37, %v33, 0
  %vm41 = vcmask 1043456
  %v43 = vsel %vm41, %v36, 0
  %45 = vmatprep.subr.bf16.mxu0 0
  %46 = vmatpush1.bf16.msra.mxu0 0
  %47 = vmatprep.subr.bf16.mxu0 0
  %48 = vmatpush1.bf16.msra.mxu0 0
  %49 = vmatprep.subr.bf16.mxu0 0
  %50 = vmatpush1.bf16.msra.mxu0 0
  %51 = vmatprep.subr.bf16.mxu0 0
  %52 = vmatpush1.bf16.msra.mxu0 0
  %53 = vmatprep.subr.bf16.mxu0 0
  %54 = vmatpush1.bf16.msra.mxu0 0
  %55 = vmatprep.subr.bf16.mxu0 0
  %56 = vmatpush1.bf16.msra.mxu0 0
  %57 = vmatprep.subr.bf16.mxu0 0
  %58 = vmatpush1.bf16.msra.mxu0 0
  %59 = vmatprep.subr.bf16.mxu0 0
  %60 = vmatpush1.bf16.msra.mxu0 %v43
  %61 = vmatprep.subr.bf16.mxu0 0
  %62 = vmatpush2.bf16.msra.mxu0 0
  %63 = vmatprep.subr.bf16.mxu0 0
  %64 = vmatpush2.bf16.msra.mxu0 0
  %65 = vmatprep.subr.bf16.mxu0 0
  %66 = vmatpush2.bf16.msra.mxu0 0
  %67 = vmatprep.subr.bf16.mxu0 0
  %68 = vmatpush2.bf16.msra.mxu0 0
  %69 = vmatprep.subr.bf16.mxu0 0
  %70 = vmatpush2.bf16.msra.mxu0 0
  %71 = vmatprep.subr.bf16.mxu0 0
  %72 = vmatpush2.bf16.msra.mxu0 0
  %73 = vmatprep.subr.bf16.mxu0 0
  %74 = vmatpush2.bf16.msra.mxu0 0
  %75 = vmatprep.subr.bf16.mxu0 0
  %76 = vmatpush2.bf16.msra.mxu0 0
  %77 = vmatprep.mubr.bf16.mxu0 0
  %78 = vmatmul.mubr.bf16.gmra.mxu0 %v39
  %v79 = vpop.f32.mrf.mxu0
  %v80 = vadd.f32 0.0, %v79
  %v81 = vpop.f32.mrf.mxu0
  %v82 = vpop.f32.mrf.mxu0
  %v83 = vpop.f32.mrf.mxu0
  %84 = vdwg.mxu0
  %v87 = vunpack.c.l.b16 %v34
  %v88 = vunpack.c.l.b16 %v35
  %v89 = vpack.c.b16 %v88, %v87
  %vm91 = vcmask 130048
  %v93 = vsel %vm91, %v31, 0
  %95 = vmatprep.subr.bf16.mxu0 0
  %96 = vmatpush1.bf16.msra.mxu0 0
  %97 = vmatprep.subr.bf16.mxu0 0
  %98 = vmatpush1.bf16.msra.mxu0 0
  %99 = vmatprep.subr.bf16.mxu0 0
  %100 = vmatpush1.bf16.msra.mxu0 0
  %101 = vmatprep.subr.bf16.mxu0 0
  %102 = vmatpush1.bf16.msra.mxu0 0
  %103 = vmatprep.subr.bf16.mxu0 0
  %104 = vmatpush1.bf16.msra.mxu0 0
  %105 = vmatprep.subr.bf16.mxu0 0
  %106 = vmatpush1.bf16.msra.mxu0 0
  %107 = vmatprep.subr.bf16.mxu0 0
  %108 = vmatpush1.bf16.msra.mxu0 0
  %109 = vmatprep.subr.bf16.mxu0 0
  %110 = vmatpush1.bf16.msra.mxu0 %v89
  %111 = vmatprep.subr.bf16.mxu0 0
  %112 = vmatpush2.bf16.msra.mxu0 0
  %113 = vmatprep.subr.bf16.mxu0 0
  %114 = vmatpush2.bf16.msra.mxu0 0
  %115 = vmatprep.subr.bf16.mxu0 0
  %116 = vmatpush2.bf16.msra.mxu0 0
  %117 = vmatprep.subr.bf16.mxu0 0
  %118 = vmatpush2.bf16.msra.mxu0 0
  %119 = vmatprep.subr.bf16.mxu0 0
  %120 = vmatpush2.bf16.msra.mxu0 0
  %121 = vmatprep.subr.bf16.mxu0 0
  %122 = vmatpush2.bf16.msra.mxu0 0
  %123 = vmatprep.subr.bf16.mxu0 0
  %124 = vmatpush2.bf16.msra.mxu0 0
  %125 = vmatprep.subr.bf16.mxu0 0
  %126 = vmatpush2.bf16.msra.mxu0 0
  %127 = vmatprep.mubr.bf16.mxu0 0
  %128 = vmatmul.mubr.bf16.gmra.mxu0 %v93
  %v129 = vpop.f32.mrf.mxu0
  %v130 = vadd.f32 %v80, %v129
  %v131 = vpop.f32.mrf.mxu0
  %v132 = vpop.f32.mrf.mxu0
  %v133 = vpop.f32.mrf.mxu0
  %134 = vdwg.mxu0
  %v135 = vld [vmem:[%s6] sm:$0x1]
  %v137 = vlaneseq
  %v138 = vshrl.u32 %v137, 7
  %v139 = vsub.s32 0, %v138
  %v140 = vrot.slane %v135, %v139
  %v142 = vadd.f32 %v130, %v140
  %v143 = vmax.f32 %v142, 0.0
  %144 = vxpose.xlu0.b32.start [1/16] %v143, 128
  %145 = vxpose.xlu0.b32.cont [2/16] 0.0, 128
  %146 = vxpose.xlu0.b32.cont [3/16] 0.0, 128
  %147 = vxpose.xlu0.b32.cont [4/16] 0.0, 128
  %148 = vxpose.xlu0.b32.cont [5/16] 0.0, 128
  %149 = vxpose.xlu0.b32.cont [6/16] 0.0, 128
  %150 = vxpose.xlu0.b32.cont [7/16] 0.0, 128
  %151 = vxpose.xlu0.b32.cont [8/16] 0.0, 128
  %152 = vxpose.xlu0.b32.cont [9/16] 0.0, 128
  %153 = vxpose.xlu0.b32.cont [10/16] 0.0, 128
  %154 = vxpose.xlu0.b32.cont [11/16] 0.0, 128
  %155 = vxpose.xlu0.b32.cont [12/16] 0.0, 128
  %156 = vxpose.xlu0.b32.cont [13/16] 0.0, 128
  %157 = vxpose.xlu0.b32.cont [14/16] 0.0, 128
  %158 = vxpose.xlu0.b32.cont [15/16] 0.0, 128
  %159 = vxpose.xlu0.b32.end [16/16] 0.0, 128
  %v160 = vpop.trf.xlu0
  %v161 = vpop.trf.xlu0
  %v162 = vpop.trf.xlu0
  %v163 = vpop.trf.xlu0
  %v164 = vpop.trf.xlu0
  %v165 = vpop.trf.xlu0
  %v166 = vpop.trf.xlu0
  %v167 = vpop.trf.xlu0
  %v168 = vpop.trf.xlu0
  %v169 = vpop.trf.xlu0
  %v170 = vpop.trf.xlu0
  %v171 = vpop.trf.xlu0
  %v172 = vpop.trf.xlu0
  %v173 = vpop.trf.xlu0
  %v174 = vpop.trf.xlu0
  %v175 = vpop.trf.xlu0
  %v176 = vpack.c.bf16 %v161, %v160
  %v177 = vpack.c.bf16 %v163, %v162
  %v178 = vpack.c.bf16 %v165, %v164
  %v179 = vpack.c.bf16 %v167, %v166
  %v180 = vpack.c.bf16 %v169, %v168
  %v181 = vpack.c.bf16 %v171, %v170
  %v182 = vpack.c.bf16 %v173, %v172
  %v183 = vpack.c.bf16 %v175, %v174
  %v184 = vld [vmem:[%s7] sm:$0xff]
  %v185 = vld [vmem:[%s7 + $0x8] sm:$0xff]
  %v186 = vld [vmem:[%s7 + $0x10] sm:$0xff]
  %v187 = vld [vmem:[%s7 + $0x18] sm:$0xff]
  %v188 = vld [vmem:[%s7 + $0x20] sm:$0xff]
  %v189 = vld [vmem:[%s7 + $0x28] sm:$0xff]
  %v190 = vld [vmem:[%s7 + $0x30] sm:$0xff]
  %v191 = vld [vmem:[%s7 + $0x38] sm:$0xff]
  %v192 = vld [vmem:[%s7 + $0x40] sm:$0xff]
  %v193 = vld [vmem:[%s7 + $0x48] sm:$0xff]
  %v194 = vld [vmem:[%s7 + $0x50] sm:$0xff]
  %v195 = vld [vmem:[%s7 + $0x58] sm:$0xff]
  %v196 = vld [vmem:[%s7 + $0x60] sm:$0xff]
  %v197 = vld [vmem:[%s7 + $0x68] sm:$0xff]
  %v198 = vld [vmem:[%s7 + $0x70] sm:$0xff]
  %v199 = vld [vmem:[%s7 + $0x78] sm:$0xff]
  %v200 = vld [vmem:[%s4] sm:$0xf]
  %v201 = vld [vmem:[%s4 + $0x4] sm:$0xf]
  %v202 = vld [vmem:[%s4 + $0x8] sm:$0xf]
  %v203 = vld [vmem:[%s4 + $0xc] sm:$0xf]
  %v204 = vld [vmem:[%s4 + $0x10] sm:$0xf]
  %v205 = vld [vmem:[%s4 + $0x14] sm:$0xf]
  %v206 = vld [vmem:[%s4 + $0x18] sm:$0xf]
  %v207 = vld [vmem:[%s4 + $0x1c] sm:$0xf]
  %v208 = vld [vmem:[%s4 + $0x20] sm:$0xf]
  %v209 = vld [vmem:[%s4 + $0x24] sm:$0xf]
  %v210 = vld [vmem:[%s4 + $0x28] sm:$0xf]
  %v211 = vld [vmem:[%s4 + $0x2c] sm:$0xf]
  %v212 = vld [vmem:[%s4 + $0x30] sm:$0xf]
  %v213 = vld [vmem:[%s4 + $0x34] sm:$0xf]
  %v214 = vld [vmem:[%s4 + $0x38] sm:$0xf]
  %v215 = vld [vmem:[%s4 + $0x3c] sm:$0xf]
  %217 = vset.pattern.permute.xlu0 0
  %218 = vperm.xlu0 %217, %v184
  %v219 = vpop.permute.xlu0 %218
  %222 = vset.pattern.permute.xlu0 0
  %223 = vperm.xlu0 %222, %v185
  %v224 = vpop.permute.xlu0 %223
  %227 = vset.pattern.permute.xlu0 0
  %228 = vperm.xlu0 %227, %v186
  %v229 = vpop.permute.xlu0 %228
  %232 = vset.pattern.permute.xlu0 0
  %233 = vperm.xlu0 %232, %v187
  %v234 = vpop.permute.xlu0 %233
  %237 = vset.pattern.permute.xlu0 0
  %238 = vperm.xlu0 %237, %v188
  %v239 = vpop.permute.xlu0 %238
  %242 = vset.pattern.permute.xlu0 0
  %243 = vperm.xlu0 %242, %v189
  %v244 = vpop.permute.xlu0 %243
  %247 = vset.pattern.permute.xlu0 0
  %248 = vperm.xlu0 %247, %v190
  %v249 = vpop.permute.xlu0 %248
  %252 = vset.pattern.permute.xlu0 0
  %253 = vperm.xlu0 %252, %v191
  %v254 = vpop.permute.xlu0 %253
  %257 = vset.pattern.permute.xlu0 0
  %258 = vperm.xlu0 %257, %v192
  %v259 = vpop.permute.xlu0 %258
  %262 = vset.pattern.permute.xlu0 0
  %263 = vperm.xlu0 %262, %v193
  %v264 = vpop.permute.xlu0 %263
  %267 = vset.pattern.permute.xlu0 0
  %268 = vperm.xlu0 %267, %v194
  %v269 = vpop.permute.xlu0 %268
  %272 = vset.pattern.permute.xlu0 0
  %273 = vperm.xlu0 %272, %v195
  %v274 = vpop.permute.xlu0 %273
  %277 = vset.pattern.permute.xlu0 0
  %278 = vperm.xlu0 %277, %v196
  %v279 = vpop.permute.xlu0 %278
  %282 = vset.pattern.permute.xlu0 0
  %283 = vperm.xlu0 %282, %v197
  %v284 = vpop.permute.xlu0 %283
  %287 = vset.pattern.permute.xlu0 0
  %288 = vperm.xlu0 %287, %v198
  %v289 = vpop.permute.xlu0 %288
  %292 = vset.pattern.permute.xlu0 0
  %293 = vperm.xlu0 %292, %v199
  %v294 = vpop.permute.xlu0 %293
  %v312 = vunpack.c.l.b16 %v200
  %v313 = vunpack.c.l.b16 %v201
  %v314 = vunpack.c.l.b16 %v202
  %v315 = vunpack.c.l.b16 %v203
  %v316 = vunpack.c.l.b16 %v204
  %v317 = vunpack.c.l.b16 %v205
  %v318 = vunpack.c.l.b16 %v206
  %v319 = vunpack.c.l.b16 %v207
  %v320 = vunpack.c.l.b16 %v208
  %v321 = vunpack.c.l.b16 %v209
  %v322 = vunpack.c.l.b16 %v210
  %v323 = vunpack.c.l.b16 %v211
  %v324 = vunpack.c.l.b16 %v212
  %v325 = vunpack.c.l.b16 %v213
  %v326 = vunpack.c.l.b16 %v214
  %v327 = vunpack.c.l.b16 %v215
  %v328 = vpack.c.b16 %v313, %v312
  %v329 = vpack.c.b16 %v315, %v314
  %v330 = vpack.c.b16 %v317, %v316
  %v331 = vpack.c.b16 %v319, %v318
  %v332 = vpack.c.b16 %v321, %v320
  %v333 = vpack.c.b16 %v323, %v322
  %v334 = vpack.c.b16 %v325, %v324
  %v335 = vpack.c.b16 %v327, %v326
  %344 = vmatprep.subr.bf16.mxu0 0
  %345 = vmatpush1.bf16.msra.mxu0 %v183
  %346 = vmatprep.subr.bf16.mxu0 0
  %347 = vmatpush1.bf16.msra.mxu0 %v182
  %348 = vmatprep.subr.bf16.mxu0 0
  %349 = vmatpush1.bf16.msra.mxu0 %v181
  %350 = vmatprep.subr.bf16.mxu0 0
  %351 = vmatpush1.bf16.msra.mxu0 %v180
  %352 = vmatprep.subr.bf16.mxu0 0
  %353 = vmatpush1.bf16.msra.mxu0 %v179
  %354 = vmatprep.subr.bf16.mxu0 0
  %355 = vmatpush1.bf16.msra.mxu0 %v178
  %356 = vmatprep.subr.bf16.mxu0 0
  %357 = vmatpush1.bf16.msra.mxu0 %v177
  %358 = vmatprep.subr.bf16.mxu0 0
  %359 = vmatpush1.bf16.msra.mxu0 %v176
  %360 = vmatprep.subr.bf16.mxu0 0
  %361 = vmatpush2.bf16.msra.mxu0 0
  %362 = vmatprep.subr.bf16.mxu0 0
  %363 = vmatpush2.bf16.msra.mxu0 0
  %364 = vmatprep.subr.bf16.mxu0 0
  %365 = vmatpush2.bf16.msra.mxu0 0
  %366 = vmatprep.subr.bf16.mxu0 0
  %367 = vmatpush2.bf16.msra.mxu0 0
  %368 = vmatprep.subr.bf16.mxu0 0
  %369 = vmatpush2.bf16.msra.mxu0 0
  %370 = vmatprep.subr.bf16.mxu0 0
  %371 = vmatpush2.bf16.msra.mxu0 0
  %372 = vmatprep.subr.bf16.mxu0 0
  %373 = vmatpush2.bf16.msra.mxu0 0
  %374 = vmatprep.subr.bf16.mxu0 0
  %375 = vmatpush2.bf16.msra.mxu0 0
  %376 = vmatprep.mubr.bf16.mxu0 0
  %377 = vmatmul.mubr.bf16.gmra.mxu0 %v328
  %v378 = vpop.f32.mrf.mxu0
  %v379 = vadd.f32 %v219, %v378
  %v380 = vpop.f32.mrf.mxu0
  %v381 = vpop.f32.mrf.mxu0
  %v382 = vadd.f32 %v224, %v381
  %v383 = vpop.f32.mrf.mxu0
  %384 = vmatprep.mubr.bf16.mxu0 0
  %385 = vmatmul.mubr.bf16.gmra.mxu0 %v329
  %v386 = vpop.f32.mrf.mxu0
  %v387 = vadd.f32 %v229, %v386
  %v388 = vpop.f32.mrf.mxu0
  %v389 = vpop.f32.mrf.mxu0
  %v390 = vadd.f32 %v234, %v389
  %v391 = vpop.f32.mrf.mxu0
  %392 = vmatprep.mubr.bf16.mxu0 0
  %393 = vmatmul.mubr.bf16.gmra.mxu0 %v330
  %v394 = vpop.f32.mrf.mxu0
  %v395 = vadd.f32 %v239, %v394
  %v396 = vpop.f32.mrf.mxu0
  %v397 = vpop.f32.mrf.mxu0
  %v398 = vadd.f32 %v244, %v397
  %v399 = vpop.f32.mrf.mxu0
  %400 = vmatprep.mubr.bf16.mxu0 0
  %401 = vmatmul.mubr.bf16.gmra.mxu0 %v331
  %v402 = vpop.f32.mrf.mxu0
  %v403 = vadd.f32 %v249, %v402
  %v404 = vpop.f32.mrf.mxu0
  %v405 = vpop.f32.mrf.mxu0
  %v406 = vadd.f32 %v254, %v405
  %v407 = vpop.f32.mrf.mxu0
  %408 = vmatprep.mubr.bf16.mxu0 0
  %409 = vmatmul.mubr.bf16.gmra.mxu0 %v332
  %v410 = vpop.f32.mrf.mxu0
  %v411 = vadd.f32 %v259, %v410
  %v412 = vpop.f32.mrf.mxu0
  %v413 = vpop.f32.mrf.mxu0
  %v414 = vadd.f32 %v264, %v413
  %v415 = vpop.f32.mrf.mxu0
  %416 = vmatprep.mubr.bf16.mxu0 0
  %417 = vmatmul.mubr.bf16.gmra.mxu0 %v333
  %v418 = vpop.f32.mrf.mxu0
  %v419 = vadd.f32 %v269, %v418
  %v420 = vpop.f32.mrf.mxu0
  %v421 = vpop.f32.mrf.mxu0
  %v422 = vadd.f32 %v274, %v421
  %v423 = vpop.f32.mrf.mxu0
  %424 = vmatprep.mubr.bf16.mxu0 0
  %425 = vmatmul.mubr.bf16.gmra.mxu0 %v334
  %v426 = vpop.f32.mrf.mxu0
  %v427 = vadd.f32 %v279, %v426
  %v428 = vpop.f32.mrf.mxu0
  %v429 = vpop.f32.mrf.mxu0
  %v430 = vadd.f32 %v284, %v429
  %v431 = vpop.f32.mrf.mxu0
  %432 = vmatprep.mubr.bf16.mxu0 0
  %433 = vmatmul.mubr.bf16.gmra.mxu0 %v335
  %v434 = vpop.f32.mrf.mxu0
  %v435 = vadd.f32 %v289, %v434
  %v436 = vpop.f32.mrf.mxu0
  %v437 = vpop.f32.mrf.mxu0
  %v438 = vadd.f32 %v294, %v437
  %v439 = vpop.f32.mrf.mxu0
  %440 = vdwg.mxu0
  %v441 = vmax.f32 %v379, 0.0
  %v442 = vmax.f32 %v382, 0.0
  %v443 = vmax.f32 %v387, 0.0
  %v444 = vmax.f32 %v390, 0.0
  %v445 = vmax.f32 %v395, 0.0
  %v446 = vmax.f32 %v398, 0.0
  %v447 = vmax.f32 %v403, 0.0
  %v448 = vmax.f32 %v406, 0.0
  %v449 = vmax.f32 %v411, 0.0
  %v450 = vmax.f32 %v414, 0.0
  %v451 = vmax.f32 %v419, 0.0
  %v452 = vmax.f32 %v422, 0.0
  %v453 = vmax.f32 %v427, 0.0
  %v454 = vmax.f32 %v430, 0.0
  %v455 = vmax.f32 %v435, 0.0
  %v456 = vmax.f32 %v438, 0.0
  %v457 = vpack.c.bf16 %v442, %v441
  %v458 = vpack.c.bf16 %v444, %v443
  %v459 = vpack.c.bf16 %v446, %v445
  %v460 = vpack.c.bf16 %v448, %v447
  %v461 = vpack.c.bf16 %v450, %v449
  %v462 = vpack.c.bf16 %v452, %v451
  %v463 = vpack.c.bf16 %v454, %v453
  %v464 = vpack.c.bf16 %v456, %v455
  %v465 = vld [vmem:[%s5] sm:$0xf]
  %466 = vset.pattern.permute.xlu0 1
  %467 = vperm.xlu0 %466, %v184
  %v468 = vpop.permute.xlu0 %467
  %470 = vmatprep.subr.bf16.mxu0 0
  %471 = vmatpush1.bf16.msra.mxu0 %v464
  %472 = vmatprep.subr.bf16.mxu0 0
  %473 = vmatpush1.bf16.msra.mxu0 %v463
  %474 = vmatprep.subr.bf16.mxu0 0
  %475 = vmatpush1.bf16.msra.mxu0 %v462
  %476 = vmatprep.subr.bf16.mxu0 0
  %477 = vmatpush1.bf16.msra.mxu0 %v461
  %478 = vmatprep.subr.bf16.mxu0 0
  %479 = vmatpush1.bf16.msra.mxu0 %v460
  %480 = vmatprep.subr.bf16.mxu0 0
  %481 = vmatpush1.bf16.msra.mxu0 %v459
  %482 = vmatprep.subr.bf16.mxu0 0
  %483 = vmatpush1.bf16.msra.mxu0 %v458
  %484 = vmatprep.subr.bf16.mxu0 0
  %485 = vmatpush1.bf16.msra.mxu0 %v457
  %486 = vmatprep.subr.bf16.mxu0 0
  %487 = vmatpush2.bf16.msra.mxu0 0
  %488 = vmatprep.subr.bf16.mxu0 0
  %489 = vmatpush2.bf16.msra.mxu0 0
  %490 = vmatprep.subr.bf16.mxu0 0
  %491 = vmatpush2.bf16.msra.mxu0 0
  %492 = vmatprep.subr.bf16.mxu0 0
  %493 = vmatpush2.bf16.msra.mxu0 0
  %494 = vmatprep.subr.bf16.mxu0 0
  %495 = vmatpush2.bf16.msra.mxu0 0
  %496 = vmatprep.subr.bf16.mxu0 0
  %497 = vmatpush2.bf16.msra.mxu0 0
  %498 = vmatprep.subr.bf16.mxu0 0
  %499 = vmatpush2.bf16.msra.mxu0 0
  %500 = vmatprep.subr.bf16.mxu0 0
  %501 = vmatpush2.bf16.msra.mxu0 0
  %502 = vmatprep.mubr.bf16.mxu0 0
  %503 = vmatmul.mubr.bf16.gmra.mxu0 %v465
  %v504 = vpop.f32.mrf.mxu0
  %v505 = vadd.f32 %v468, %v504
  %v506 = vpop.f32.mrf.mxu0
  %v507 = vpop.f32.mrf.mxu0
  %v508 = vpop.f32.mrf.mxu0
  %509 = vdwg.mxu0
  %510 = vst.msk [vmem:[%s8] sm:$0xff] %vm37, %v505
  // Predicated region
  $region34: #{critic_forward.1} parent=0 // pred_check
    _
  $region35: #{critic_forward.1} parent=0 // pred_check_branch
    %512 = sbr.rel (0) target = $region37
  $region36: #{critic_forward.1} parent=0 // pred_region
    _
  $region37: #{critic_forward.1} parent=0 // pred_fallthru
    _
  // Predicated region
  $region38: #{critic_forward.1} parent=0 // pred_check
    _
  $region39: #{critic_forward.1} parent=0 // pred_check_branch
    %514 = sbr.rel (0) target = $region41
  $region40: #{critic_forward.1} parent=0 // pred_region
    _
  $region41: #{critic_forward.1} parent=0 // pred_fallthru
    _

</llo_original>
